<compile_context>
chip_gen: v7x
topology: tpu7x:2x2x1
jax: 0.10.0
libtpu: 0.0.40
codegen_flags: <defaults>
</compile_context>

<pallas_src>
import functools

import jax
import jax.numpy as jnp
from jax.experimental import pallas as pl
from jax.experimental.pallas import tpu as pltpu

_NEG_BIG = -1.0e30  # finite "minus infinity" (avoids inf-inf NaNs in exp)


def _round_up(x, m):
    return (x + m - 1) // m * m


def _pad2(x, rows, cols):
    return jnp.pad(x, ((0, rows - x.shape[0]), (0, cols - x.shape[1])))


@functools.lru_cache(maxsize=1)
def _vmem_capacity_bytes():
    try:
        return int(pltpu.get_tpu_info().vmem_capacity_bytes)
    except Exception:
        return 64 * 1024 * 1024  # conservative (v7x-like) fallback


def _is_small_vmem():
    # v7x: 64 MiB VMEM per TC and 2 TCs/chip; v5e/v6e: 128 MiB, 1 TC.
    return _vmem_capacity_bytes() < 100 * 1024 * 1024


def _choose_tb(B):
    """Anchor-tile rows.  Larger TB cuts bank re-streaming (ceil(B/TB) passes)
    and fills the 256x256 MXU on v6e/v7x; on dual-core (v7x-like) chips cap TB
    so the 'parallel' B axis has >= 2 blocks."""
    if B >= 512:
        tb = 512
    elif B >= 256:
        tb = 256
    elif B >= 128:
        tb = 128
    else:
        tb = _round_up(max(B, 1), 8)
    if _is_small_vmem() and tb >= 256 and _round_up(B, tb) // tb < 2:
        tb //= 2
    return tb


def _vmem_estimate(tb, tn, d_pad, bank_bytes):
    return (2 * tn * d_pad * bank_bytes   # double-buffered contrast tile
            + 2 * tb * d_pad * 4          # anchor tile (pessimistic f32)
            + 8 * tb * tn * 4             # live (tb, tn) f32/bool temporaries
            + 2 * 2 * tn * 4              # packed column metadata
            + 64 * tb * 4                 # row metadata, stats, output block
            + (2 << 20))


def _choose_tn(tb, n, d_pad, bank_bytes, block_n=None):
    """Streamed contrast-tile width: as wide as VMEM allows (multiple of 256
    for the v6e/v7x MXU) so the ~0.35us per-grid-step overhead amortizes."""
    cap = _vmem_capacity_bytes()
    budget = int(cap * 0.70)
    base = block_n if block_n is not None else (2048 if _is_small_vmem() else 4096)
    base = max(256, _round_up(int(base), 256))
    tn = max(256, min(base, _round_up(max(n, 1), 256)))
    while tn > 256 and _vmem_estimate(tb, tn, d_pad, bank_bytes) > budget:
        tn -= 256
    return tn


# ----------------------------------------------------------------------------
# Kernel: one contrast segment, streamed over its columns (online softmax).
# Per anchor row (accumulated in VMEM scratch across the "arbitrary" N axis,
# stored once per anchor tile as output columns [m, l, a, n]):
#   m = running max of logits over real columns   (numerics; shift-invariant)
#   l = sum exp(logit - m) over logits_mask columns
#   a = sum pos_mask * logit  (UNshifted; merged shift-invariantly in wrapper)
#   n = sum pos_mask
# ----------------------------------------------------------------------------
def _supcon_segment_kernel(n_real, f_ref, c_ref, rmeta_ref, cmeta_ref,
                           out_ref, m_sc, l_sc, a_sc, n_sc):
    ni = pl.program_id(1)

    @pl.when(ni == 0)
    def _init():
        m_sc[...] = jnp.full_like(m_sc, _NEG_BIG)
        l_sc[...] = jnp.zeros_like(l_sc)
        a_sc[...] = jnp.zeros_like(a_sc)
        n_sc[...] = jnp.zeros_like(n_sc)

    # MXU: contract feature (last) dims -> (TB, TN) logits tile, f32 accum.
    # Anchors were pre-scaled by 1/temperature and pre-cast in the wrapper,
    # so no per-step cast or full-tile multiply is needed here.
    adc = jax.lax.dot_general(
        f_ref[...], c_ref[...], (((1,), (1,)), ((), ())),
        preferred_element_type=jnp.float32)

    tb, tn = adc.shape
    col = jax.lax.broadcasted_iota(jnp.int32, (1, tn), 1) + ni * tn
    col_valid = col < n_real                       # masks the N-padding columns

    rlab = rmeta_ref[:, 0:1]                       # (TB, 1) anchor labels
    rid = rmeta_ref[:, 1:2]                        # (TB, 1) anchor exclusion ids
    clab = cmeta_ref[0:1, :]                       # (1, TN) contrast labels
    cid = cmeta_ref[1:2, :]                        # (1, TN) contrast exclusion ids

    # Boolean masks built on-chip; applied via jnp.where (no f32 mask builds
    # or full-tile multiplies).
    keep = jnp.logical_and(rid != cid, col_valid)          # logits_mask
    pos = jnp.logical_and(keep, rlab == clab)              # mask * logits_mask

    # Online softmax over the streamed columns (max over ALL real columns,
    # matching torch's logits_max; the final loss is shift-invariant).
    adc_v = jnp.where(col_valid, adc, _NEG_BIG)
    m_prev = m_sc[...]
    m_new = jnp.maximum(m_prev, jnp.max(adc_v, axis=1, keepdims=True))
    p = jnp.where(keep, jnp.exp(adc_v - m_new), 0.0)
    l_sc[...] = jnp.exp(m_prev - m_new) * l_sc[...] + jnp.sum(p, axis=1,
                                                              keepdims=True)
    m_sc[...] = m_new
    # Positive-pair sums on the UNshifted logits (shift-invariant finalize).
    a_sc[...] += jnp.sum(jnp.where(pos, adc, 0.0), axis=1, keepdims=True)
    n_sc[...] += jnp.sum(pos.astype(jnp.float32), axis=1, keepdims=True)

    # Single consolidated stat store per anchor tile (one HBM writeback).
    @pl.when(ni == pl.num_programs(1) - 1)
    def _fin():
        out_ref[:, 0:1] = m_sc[...]
        out_ref[:, 1:2] = l_sc[...]
        out_ref[:, 2:3] = a_sc[...]
        out_ref[:, 3:4] = n_sc[...]


def _segment_stats(feats_p, rmeta_p, contrast, col_lab, col_ids,
                   tb, d_pad, matmul_dtype, block_n=None):
    """Run the streamed kernel for one contrast segment -> (b_pad, 4) stats."""
    b_pad = feats_p.shape[0]
    n = contrast.shape[0]
    bank_bytes = jnp.dtype(matmul_dtype).itemsize

    tn = _choose_tn(tb, n, d_pad, bank_bytes, block_n)
    n_pad = _round_up(max(n, 1), tn)

    contrast_p = _pad2(contrast.astype(matmul_dtype), n_pad, d_pad)
    cmeta_p = _pad2(
        jnp.stack([jnp.asarray(col_lab, jnp.int32).reshape(-1),
                   jnp.asarray(col_ids, jnp.int32).reshape(-1)], axis=0),
        2, n_pad)

    nb = b_pad // tb
    nn = n_pad // tn

    cap = _vmem_capacity_bytes()
    vmem_limit = int(min(cap - 4 * 1024 * 1024,
                         max(32 * 1024 * 1024,
                             int(1.3 * _vmem_estimate(tb, tn, d_pad,
                                                      bank_bytes)))))

    return pl.pallas_call(
        functools.partial(_supcon_segment_kernel, n),
        out_shape=jax.ShapeDtypeStruct((b_pad, 4), jnp.float32),
        grid=(nb, nn),
        in_specs=[
            pl.BlockSpec((tb, d_pad), lambda bi, ni: (bi, 0)),  # anchors (resident)
            pl.BlockSpec((tn, d_pad), lambda bi, ni: (ni, 0)),  # streamed contrast
            pl.BlockSpec((tb, 2), lambda bi, ni: (bi, 0)),      # row labels + excl ids
            pl.BlockSpec((2, tn), lambda bi, ni: (0, ni)),      # col labels + excl ids
        ],
        out_specs=pl.BlockSpec((tb, 4), lambda bi, ni: (bi, 0)),
        scratch_shapes=[pltpu.VMEM((tb, 1), jnp.float32) for _ in range(4)],
        compiler_params=pltpu.CompilerParams(
            dimension_semantics=("parallel", "arbitrary"),
            vmem_limit_bytes=vmem_limit),
    )(feats_p, contrast_p, rmeta_p, cmeta_p)


def _dense_segment_stats(features, row_lab, row_ids, contrast, col_lab,
                         col_ids, inv_temp):
    """Tiny (batch-vs-batch) segment in plain JAX: a dedicated pallas_call
    would be dominated by launch/prologue overhead.  Same (m, l, a, n) stats."""
    adc = (features @ contrast.T) * inv_temp                     # (B, Nc) f32
    clab = jnp.asarray(col_lab, jnp.int32).reshape(1, -1)
    cid = jnp.asarray(col_ids, jnp.int32).reshape(1, -1)
    keep = row_ids != cid
    pos = jnp.logical_and(keep, row_lab == clab)
    m = jnp.max(adc, axis=1, keepdims=True)
    l = jnp.sum(jnp.where(keep, jnp.exp(adc - m), 0.0), axis=1, keepdims=True)
    a = jnp.sum(jnp.where(pos, adc, 0.0), axis=1, keepdims=True)
    cnt = jnp.sum(pos.astype(jnp.float32), axis=1, keepdims=True)
    return jnp.concatenate([m, l, a, cnt], axis=1)               # (B, 4)


# ----------------------------------------------------------------------------
# Module wrapper reproducing CompatibleSupContrastiveLoss.forward semantics.
# ----------------------------------------------------------------------------
class CompatibleSupContrastiveLoss:
    def __init__(self, cfg=None, temperature=0.07, base_temperature=0.07,
                 matmul_dtype=jnp.bfloat16, block_n=None):
        self.cfg = cfg
        self.temperature = float(temperature)
        self.base_temperature = float(base_temperature)
        # bf16 bank halves the HBM stream and uses the fast MXU path (softmax
        # math stays f32).  Pass jnp.float32 for bit-faithful torch math.
        self.matmul_dtype = matmul_dtype
        self.block_n = block_n  # streamed contrast-tile width override (auto if None)

    def __call__(self, features, labels, old_features, old_labels,
                 newxbm_features=None, newxbm_labels=None,
                 img_ids=None, old_img_ids=None, newxbm_img_ids=None,
                 withnew=False, withnewxbm=False):
        features = jnp.asarray(features, jnp.float32)
        old_features = jnp.asarray(old_features, jnp.float32)
        B, D = features.shape
        M = old_features.shape[0]
        inv_temp = 1.0 / self.temperature

        # Integer comparisons for labels / image ids (f32 equality loses
        # precision for ids >= 2**24).
        lab = jnp.asarray(labels, jnp.int32).reshape(B, 1)
        old_lab = jnp.asarray(old_labels, jnp.int32).reshape(-1)
        row_idx = jnp.arange(B, dtype=jnp.int32).reshape(B, 1)

        # Segment tuples: (contrast (N,D), col_labels (N,), row_excl (B,1),
        # col_excl (N,)).  logits_mask[i,j] = 0 iff row_excl[i] == col_excl[j].
        streamed = []   # big memory banks -> Pallas kernel
        dense = []      # tiny batch-vs-batch segment -> plain JAX

        if not withnew:
            # TODO(synk): torch's forward passes 6 args to the 4-arg
            # _cal_loss_wo_new (a bug in the reference); the intended wo_new
            # semantics (exclude column i for anchor i) are implemented here.
            streamed.append((old_features, old_lab, row_idx,
                             jnp.arange(M, dtype=jnp.int32)))
        elif withnew and not withnewxbm:
            if img_ids is None and old_img_ids is None:
                streamed.append((old_features, old_lab, row_idx,
                                 jnp.arange(M, dtype=jnp.int32)))
            else:
                iid = jnp.asarray(img_ids, jnp.int32).reshape(B, 1)
                oiid = jnp.asarray(old_img_ids, jnp.int32).reshape(-1)
                streamed.append((old_features, old_lab, iid, oiid))
            dense.append((features, lab.reshape(-1), row_idx,
                          jnp.arange(B, dtype=jnp.int32)))
        else:
            newxbm_features = jnp.asarray(newxbm_features, jnp.float32)
            nx_lab = jnp.asarray(newxbm_labels, jnp.int32).reshape(-1)
            iid = jnp.asarray(img_ids, jnp.int32).reshape(B, 1)
            oiid = jnp.asarray(old_img_ids, jnp.int32).reshape(-1)
            nxiid = jnp.asarray(newxbm_img_ids, jnp.int32).reshape(-1)
            streamed.append((old_features, old_lab, iid, oiid))
            streamed.append((newxbm_features, nx_lab, iid, nxiid))
            dense.append((features, lab.reshape(-1), row_idx,
                          jnp.arange(B, dtype=jnp.int32)))

        d_pad = _round_up(D, 128)
        tb = _choose_tb(B)
        b_pad = _round_up(B, tb)

        # Fold 1/temperature into the anchors once and pre-cast to the matmul
        # dtype: no per-step full-tile multiply or cast in the kernel, and the
        # anchor DMA is half-width in bf16.
        feats_mm = (features * inv_temp).astype(self.matmul_dtype)
        feats_p = _pad2(feats_mm, b_pad, d_pad)

        seg_stats = []
        for contrast, col_lab, row_excl, col_excl in streamed:
            rmeta_p = _pad2(jnp.concatenate(
                [lab, jnp.asarray(row_excl, jnp.int32).reshape(B, 1)], axis=1),
                b_pad, 2)
            s = _segment_stats(feats_p, rmeta_p, contrast, col_lab, col_excl,
                               tb, d_pad, self.matmul_dtype, self.block_n)
            seg_stats.append(s[:B])    # drop padded anchor rows (garbage stats)
        for contrast, col_lab, row_excl, col_excl in dense:
            seg_stats.append(_dense_segment_stats(
                features, lab, jnp.asarray(row_excl, jnp.int32).reshape(B, 1),
                contrast, col_lab, col_excl, inv_temp))

        # Merge per-segment online-softmax statistics (O(B) work, fused by XLA).
        ms = jnp.stack([s[:, 0] for s in seg_stats], axis=1)
        ls = jnp.stack([s[:, 1] for s in seg_stats], axis=1)
        m_tot = jnp.max(ms, axis=1)
        l_tot = jnp.sum(ls * jnp.exp(ms - m_tot[:, None]), axis=1)
        a_tot = sum(s[:, 2] for s in seg_stats)
        n_tot = sum(s[:, 3] for s in seg_stats)

        # Shift-invariant finalize -> identical to the torch formula.
        # (Anchors with zero positives give NaN, same as the torch reference.)
        mean_log_prob_pos = a_tot / n_tot - (m_tot + jnp.log(l_tot))
        loss = -(self.temperature / self.base_temperature) * mean_log_prob_pos
        return jnp.mean(loss)


# ----------------------------------------------------------------------------
# Pure-JAX references (direct transcription of the torch math).
# ----------------------------------------------------------------------------
def _ref_supcon(features, contrast, pos_mask, logits_mask, T, bT):
    adc = (features @ contrast.T) / T
    logits = adc - jnp.max(adc, axis=1, keepdims=True)
    mask = pos_mask * logits_mask
    exp_logits = jnp.exp(logits) * logits_mask
    log_prob = logits - jnp.log(exp_logits.sum(1, keepdims=True))
    mlpp = (mask * log_prob).sum(1) / mask.sum(1)
    return (-(T / bT) * mlpp).mean()


def _ref_wo_new(f, lab, of, olab, T, bT):
    B, M = f.shape[0], of.shape[0]
    pos = (lab.reshape(-1, 1) == olab.reshape(1, -1)).astype(jnp.float32)
    lm = 1.0 - (jnp.arange(B).reshape(-1, 1) == jnp.arange(M).reshape(1, -1)
                ).astype(jnp.float32)
    return _ref_supcon(f, of, pos, lm, T, bT)


def _ref_wi_new(f, lab, of, olab, iid, oiid, T, bT):
    B = f.shape[0]
    contrast = jnp.concatenate([of, f], 0)
    pos = (lab.reshape(-1, 1) == jnp.concatenate([olab, lab]).reshape(1, -1)
           ).astype(jnp.float32)
    old_lm = 1.0 - (iid.reshape(-1, 1) == oiid.reshape(1, -1)).astype(jnp.float32)
    new_lm = 1.0 - jnp.eye(B, dtype=jnp.float32)
    lm = jnp.concatenate([old_lm, new_lm], 1)
    return _ref_supcon(f, contrast, pos, lm, T, bT)


def _ref_wi_newxbm(f, lab, of, olab, xf, xlab, iid, oiid, xiid, T, bT):
    B = f.shape[0]
    contrast = jnp.concatenate([of, xf, f], 0)
    all_lab = jnp.concatenate([olab, xlab, lab]).reshape(1, -1)
    pos = (lab.reshape(-1, 1) == all_lab).astype(jnp.float32)
    old_lm = 1.0 - (iid.reshape(-1, 1) == oiid.reshape(1, -1)).astype(jnp.float32)
    x_lm = 1.0 - (iid.reshape(-1, 1) == xiid.reshape(1, -1)).astype(jnp.float32)
    new_lm = 1.0 - jnp.eye(B, dtype=jnp.float32)
    lm = jnp.concatenate([old_lm, x_lm, new_lm], 1)
    return _ref_supcon(f, contrast, pos, lm, T, bT)


if __name__ == "__main__":
    B, M, K, D = 8, 16, 8, 32  # batch, old-memory size, new-xbm size, feat dim
    key = jax.random.PRNGKey(0)
    kf, ko, kx = jax.random.split(key, 3)

    feats = jax.random.normal(kf, (B, D), jnp.float32)
    feats = feats / jnp.linalg.norm(feats, axis=1, keepdims=True)
    old_feats = jax.random.normal(ko, (M, D), jnp.float32)
    old_feats = old_feats / jnp.linalg.norm(old_feats, axis=1, keepdims=True)
    xbm_feats = jax.random.normal(kx, (K, D), jnp.float32)
    xbm_feats = xbm_feats / jnp.linalg.norm(xbm_feats, axis=1, keepdims=True)

    labels = jnp.arange(B) % 3            # every anchor has positives
    old_labels = jnp.arange(M) % 3
    xbm_labels = jnp.arange(K) % 3
    img_ids = jnp.arange(B)
    old_img_ids = 1000 + jnp.arange(M)    # disjoint from batch img_ids
    xbm_img_ids = 2000 + jnp.arange(K)

    T, bT = 0.07, 0.07

    # Tight checks with an f32 bank (bit-faithful softmax path).
    loss_f32 = CompatibleSupContrastiveLoss(cfg=None, temperature=T,
                                            base_temperature=bT,
                                            matmul_dtype=jnp.float32)

    # Branch 1: withnew=False  (_cal_loss_wo_new)
    got = jax.block_until_ready(loss_f32(feats, labels, old_feats, old_labels))
    want = _ref_wo_new(feats, labels, old_feats, old_labels, T, bT)
    assert jnp.allclose(got, want, atol=2e-3, rtol=2e-3), ("wo_new", got, want)

    # Branch 2: withnew=True, img_ids given  (_cal_loss_wi_new)
    got = jax.block_until_ready(
        loss_f32(feats, labels, old_feats, old_labels,
                 img_ids=img_ids, old_img_ids=old_img_ids, withnew=True))
    want = _ref_wi_new(feats, labels, old_feats, old_labels,
                       img_ids, old_img_ids, T, bT)
    assert jnp.allclose(got, want, atol=2e-3, rtol=2e-3), ("wi_new", got, want)

    # Branch 3: withnew=True, withnewxbm=True  (_cal_loss_wi_newxbm)
    got = jax.block_until_ready(
        loss_f32(feats, labels, old_feats, old_labels,
                 newxbm_features=xbm_feats, newxbm_labels=xbm_labels,
                 img_ids=img_ids, old_img_ids=old_img_ids,
                 newxbm_img_ids=xbm_img_ids, withnew=True, withnewxbm=True))
    want = _ref_wi_newxbm(feats, labels, old_feats, old_labels,
                          xbm_feats, xbm_labels,
                          img_ids, old_img_ids, xbm_img_ids, T, bT)
    assert jnp.allclose(got, want, atol=2e-3, rtol=2e-3), ("wi_newxbm", got, want)

    # Default (bf16 bank) fast path: looser tolerance vs the f32 reference.
    loss_bf16 = CompatibleSupContrastiveLoss(cfg=None, temperature=T,
                                             base_temperature=bT)
    got = jax.block_until_ready(
        loss_bf16(feats, labels, old_feats, old_labels,
                  newxbm_features=xbm_feats, newxbm_labels=xbm_labels,
                  img_ids=img_ids, old_img_ids=old_img_ids,
                  newxbm_img_ids=xbm_img_ids, withnew=True, withnewxbm=True))
    assert jnp.allclose(got, want, atol=8e-2, rtol=5e-2), ("wi_newxbm_bf16",
                                                           got, want)

    print("KERNEL_OK")
</pallas_src>

<mosaic_0001>
module attributes {stable_mosaic.version = 11 : i64} {
  func.func @_supcon_segment_kernel(%arg0: i32, %arg1: i32, %arg2: memref<8x128xf32, #tpu.memory_space<vmem>>, %arg3: memref<256x128xf32, #tpu.memory_space<vmem>>, %arg4: memref<8x2xi32, #tpu.memory_space<vmem>>, %arg5: memref<2x256xi32, #tpu.memory_space<vmem>>, %arg6: memref<8x4xf32, #tpu.memory_space<vmem>>, %arg7: memref<8x1xf32, #tpu.memory_space<vmem>>, %arg8: memref<8x1xf32, #tpu.memory_space<vmem>>, %arg9: memref<8x1xf32, #tpu.memory_space<vmem>>, %arg10: memref<8x1xf32, #tpu.memory_space<vmem>>) attributes {dimension_semantics = [#tpu.dimension_semantics<parallel>, #tpu.dimension_semantics<arbitrary>], iteration_bounds = array<i64: 1, 1>, scalar_prefetch = 0 : i64, scratch_operands = 4 : i64, tpu.core_type = #tpu.core_type<tc>, window_params = [{transform_indices = @transform_0, window_bounds = array<i64: 8, 128>}, {transform_indices = @transform_1, window_bounds = array<i64: 256, 128>}, {transform_indices = @transform_2, window_bounds = array<i64: 8, 2>}, {transform_indices = @transform_3, window_bounds = array<i64: 2, 256>}, {transform_indices = @transform_4, window_bounds = array<i64: 8, 4>}]} {
    %c0_i32 = arith.constant 0 : i32
    %0 = arith.cmpi eq, %arg1, %c0_i32 : i32
    %1 = arith.extui %0 : i1 to i32
    %c0_i32_0 = arith.constant 0 : i32
    %2 = arith.cmpi ne, %1, %c0_i32_0 : i32
    scf.if %2 {
      %cst_36 = arith.constant -1.000000e+30 : f32
      %64 = vector.broadcast %cst_36 : f32 to vector<8x1xf32>
      %c0_37 = arith.constant 0 : index
      %c0_38 = arith.constant 0 : index
      %65 = vector.load %arg7[%c0_37, %c0_38] : memref<8x1xf32, #tpu.memory_space<vmem>>, vector<8x1xf32>
      tpu.vector_store %arg7[%c0_37, %c0_38], %64 {strides = array<i32>} : memref<8x1xf32, #tpu.memory_space<vmem>>, vector<8x1xf32>,
      %cst_39 = arith.constant 0.000000e+00 : f32
      %66 = vector.broadcast %cst_39 : f32 to vector<8x1xf32>
      %c0_40 = arith.constant 0 : index
      %c0_41 = arith.constant 0 : index
      %67 = vector.load %arg8[%c0_40, %c0_41] : memref<8x1xf32, #tpu.memory_space<vmem>>, vector<8x1xf32>
      tpu.vector_store %arg8[%c0_40, %c0_41], %66 {strides = array<i32>} : memref<8x1xf32, #tpu.memory_space<vmem>>, vector<8x1xf32>,
      %cst_42 = arith.constant 0.000000e+00 : f32
      %68 = vector.broadcast %cst_42 : f32 to vector<8x1xf32>
      %c0_43 = arith.constant 0 : index
      %c0_44 = arith.constant 0 : index
      %69 = vector.load %arg9[%c0_43, %c0_44] : memref<8x1xf32, #tpu.memory_space<vmem>>, vector<8x1xf32>
      tpu.vector_store %arg9[%c0_43, %c0_44], %68 {strides = array<i32>} : memref<8x1xf32, #tpu.memory_space<vmem>>, vector<8x1xf32>,
      %cst_45 = arith.constant 0.000000e+00 : f32
      %70 = vector.broadcast %cst_45 : f32 to vector<8x1xf32>
      %c0_46 = arith.constant 0 : index
      %c0_47 = arith.constant 0 : index
      %71 = vector.load %arg10[%c0_46, %c0_47] : memref<8x1xf32, #tpu.memory_space<vmem>>, vector<8x1xf32>
      tpu.vector_store %arg10[%c0_46, %c0_47], %70 {strides = array<i32>} : memref<8x1xf32, #tpu.memory_space<vmem>>, vector<8x1xf32>,
    } else {
    }
    %c0 = arith.constant 0 : index
    %c0_1 = arith.constant 0 : index
    %3 = vector.load %arg2[%c0, %c0_1] : memref<8x128xf32, #tpu.memory_space<vmem>>, vector<8x128xf32>
    %c0_2 = arith.constant 0 : index
    %c0_3 = arith.constant 0 : index
    %4 = vector.load %arg3[%c0_2, %c0_3] : memref<256x128xf32, #tpu.memory_space<vmem>>, vector<256x128xf32>
    %cst = arith.constant dense<0.000000e+00> : vector<8x256xf32>
    %5 = tpu.matmul %3, %4, %cst {dimension_numbers = #tpu.dot_dimension_numbers<[1], [1], [0], [0], [0, 0, 1, 0], [], []>} : vector<8x128xf32>, vector<256x128xf32>, vector<8x256xf32> -> vector<8x256xf32>
    %6 = tpu.iota {dimensions = array<i32: 1>} : vector<1x256xi32>
    %c256_i32 = arith.constant 256 : i32
    %7 = arith.muli %arg1, %c256_i32 : i32
    %8 = vector.broadcast %7 : i32 to vector<1x256xi32>
    %9 = arith.addi %6, %8 : vector<1x256xi32>
    %c16_i32 = arith.constant 16 : i32
    %10 = vector.broadcast %c16_i32 : i32 to vector<1x256xi32>
    %11 = arith.cmpi slt, %9, %10 : vector<1x256xi32>
    %c0_4 = arith.constant 0 : index
    %c0_5 = arith.constant 0 : index
    %12 = vector.load %arg4[%c0_4, %c0_5] : memref<8x2xi32, #tpu.memory_space<vmem>>, vector<8x1xi32>
    %c0_6 = arith.constant 0 : index
    %c1 = arith.constant 1 : index
    %13 = vector.load %arg4[%c0_6, %c1] : memref<8x2xi32, #tpu.memory_space<vmem>>, vector<8x1xi32>
    %c0_7 = arith.constant 0 : index
    %c0_8 = arith.constant 0 : index
    %14 = vector.load %arg5[%c0_7, %c0_8] : memref<2x256xi32, #tpu.memory_space<vmem>>, vector<1x256xi32>
    %c1_9 = arith.constant 1 : index
    %c0_10 = arith.constant 0 : index
    %15 = vector.load %arg5[%c1_9, %c0_10] : memref<2x256xi32, #tpu.memory_space<vmem>>, vector<1x256xi32>
    %16 = vector.broadcast %13 : vector<8x1xi32> to vector<8x256xi32>
    %17 = vector.broadcast %15 : vector<1x256xi32> to vector<8x256xi32>
    %18 = arith.cmpi ne, %16, %17 : vector<8x256xi32>
    %19 = vector.broadcast %11 : vector<1x256xi1> to vector<8x256xi1>
    %20 = arith.andi %18, %19 : vector<8x256xi1>
    %21 = vector.broadcast %12 : vector<8x1xi32> to vector<8x256xi32>
    %22 = vector.broadcast %14 : vector<1x256xi32> to vector<8x256xi32>
    %23 = arith.cmpi eq, %21, %22 : vector<8x256xi32>
    %24 = arith.andi %20, %23 : vector<8x256xi1>
    %cst_11 = arith.constant -1.000000e+30 : f32
    %25 = vector.shape_cast %11 : vector<1x256xi1> to vector<1x256xi1>
    %26 = vector.broadcast %25 : vector<1x256xi1> to vector<8x256xi1>
    %27 = vector.broadcast %cst_11 : f32 to vector<8x256xf32>
    %28 = arith.select %26, %5, %27 : vector<8x256xi1>, vector<8x256xf32>
    %c0_12 = arith.constant 0 : index
    %c0_13 = arith.constant 0 : index
    %29 = vector.load %arg7[%c0_12, %c0_13] : memref<8x1xf32, #tpu.memory_space<vmem>>, vector<8x1xf32>
    %cst_14 = arith.constant dense<0xFF800000> : vector<8xf32>
    %30 = vector.multi_reduction <maximumf>, %28, %cst_14 [1] : vector<8x256xf32> to vector<8xf32>
    %31 = vector.shape_cast %30 : vector<8xf32> to vector<8x1xf32>
    %32 = arith.maximumf %29, %31 : vector<8x1xf32>
    %33 = vector.broadcast %32 : vector<8x1xf32> to vector<8x256xf32>
    %34 = arith.subf %28, %33 : vector<8x256xf32>
    %35 = math.exp %34 : vector<8x256xf32>
    %cst_15 = arith.constant 0.000000e+00 : f32
    %36 = vector.broadcast %cst_15 : f32 to vector<8x256xf32>
    %37 = arith.select %20, %35, %36 : vector<8x256xi1>, vector<8x256xf32>
    %38 = arith.subf %29, %32 : vector<8x1xf32>
    %39 = math.exp %38 : vector<8x1xf32>
    %c0_16 = arith.constant 0 : index
    %c0_17 = arith.constant 0 : index
    %40 = vector.load %arg8[%c0_16, %c0_17] : memref<8x1xf32, #tpu.memory_space<vmem>>, vector<8x1xf32>
    %41 = arith.mulf %39, %40 : vector<8x1xf32>
    %cst_18 = arith.constant dense<0.000000e+00> : vector<8xf32>
    %42 = vector.multi_reduction <add>, %37, %cst_18 [1] : vector<8x256xf32> to vector<8xf32>
    %43 = vector.shape_cast %42 : vector<8xf32> to vector<8x1xf32>
    %44 = arith.addf %41, %43 : vector<8x1xf32>
    %c0_19 = arith.constant 0 : index
    %c0_20 = arith.constant 0 : index
    %45 = vector.load %arg8[%c0_19, %c0_20] : memref<8x1xf32, #tpu.memory_space<vmem>>, vector<8x1xf32>
    tpu.vector_store %arg8[%c0_19, %c0_20], %44 {strides = array<i32>} : memref<8x1xf32, #tpu.memory_space<vmem>>, vector<8x1xf32>,
    %c0_21 = arith.constant 0 : index
    %c0_22 = arith.constant 0 : index
    %46 = vector.load %arg7[%c0_21, %c0_22] : memref<8x1xf32, #tpu.memory_space<vmem>>, vector<8x1xf32>
    tpu.vector_store %arg7[%c0_21, %c0_22], %32 {strides = array<i32>} : memref<8x1xf32, #tpu.memory_space<vmem>>, vector<8x1xf32>,
    %c0_23 = arith.constant 0 : index
    %c0_24 = arith.constant 0 : index
    %47 = vector.load %arg9[%c0_23, %c0_24] : memref<8x1xf32, #tpu.memory_space<vmem>>, vector<8x1xf32>
    %cst_25 = arith.constant 0.000000e+00 : f32
    %48 = vector.broadcast %cst_25 : f32 to vector<8x256xf32>
    %49 = arith.select %24, %5, %48 : vector<8x256xi1>, vector<8x256xf32>
    %cst_26 = arith.constant dense<0.000000e+00> : vector<8xf32>
    %50 = vector.multi_reduction <add>, %49, %cst_26 [1] : vector<8x256xf32> to vector<8xf32>
    %51 = vector.shape_cast %50 : vector<8xf32> to vector<8x1xf32>
    %52 = arith.addf %47, %51 : vector<8x1xf32>
    %c0_27 = arith.constant 0 : index
    %c0_28 = arith.constant 0 : index
    %53 = vector.load %arg9[%c0_27, %c0_28] : memref<8x1xf32, #tpu.memory_space<vmem>>, vector<8x1xf32>
    tpu.vector_store %arg9[%c0_27, %c0_28], %52 {strides = array<i32>} : memref<8x1xf32, #tpu.memory_space<vmem>>, vector<8x1xf32>,
    %c0_29 = arith.constant 0 : index
    %c0_30 = arith.constant 0 : index
    %54 = vector.load %arg10[%c0_29, %c0_30] : memref<8x1xf32, #tpu.memory_space<vmem>>, vector<8x1xf32>
    %55 = arith.extui %24 : vector<8x256xi1> to vector<8x256xi32>
    %56 = arith.sitofp %55 : vector<8x256xi32> to vector<8x256xf32>
    %cst_31 = arith.constant dense<0.000000e+00> : vector<8xf32>
    %57 = vector.multi_reduction <add>, %56, %cst_31 [1] : vector<8x256xf32> to vector<8xf32>
    %58 = vector.shape_cast %57 : vector<8xf32> to vector<8x1xf32>
    %59 = arith.addf %54, %58 : vector<8x1xf32>
    %c0_32 = arith.constant 0 : index
    %c0_33 = arith.constant 0 : index
    %60 = vector.load %arg10[%c0_32, %c0_33] : memref<8x1xf32, #tpu.memory_space<vmem>>, vector<8x1xf32>
    tpu.vector_store %arg10[%c0_32, %c0_33], %59 {strides = array<i32>} : memref<8x1xf32, #tpu.memory_space<vmem>>, vector<8x1xf32>,
    %c0_i32_34 = arith.constant 0 : i32
    %61 = arith.cmpi eq, %arg1, %c0_i32_34 : i32
    %62 = arith.extui %61 : i1 to i32
    %c0_i32_35 = arith.constant 0 : i32
    %63 = arith.cmpi ne, %62, %c0_i32_35 : i32
    scf.if %63 {
      %c0_36 = arith.constant 0 : index
      %c0_37 = arith.constant 0 : index
      %64 = vector.load %arg7[%c0_36, %c0_37] : memref<8x1xf32, #tpu.memory_space<vmem>>, vector<8x1xf32>
      %c0_38 = arith.constant 0 : index
      %c0_39 = arith.constant 0 : index
      %65 = vector.load %arg6[%c0_38, %c0_39] : memref<8x4xf32, #tpu.memory_space<vmem>>, vector<8x1xf32>
      tpu.vector_store %arg6[%c0_38, %c0_39], %64 {strides = array<i32>} : memref<8x4xf32, #tpu.memory_space<vmem>>, vector<8x1xf32>,
      %c0_40 = arith.constant 0 : index
      %c0_41 = arith.constant 0 : index
      %66 = vector.load %arg8[%c0_40, %c0_41] : memref<8x1xf32, #tpu.memory_space<vmem>>, vector<8x1xf32>
      %c0_42 = arith.constant 0 : index
      %c1_43 = arith.constant 1 : index
      %67 = vector.load %arg6[%c0_42, %c1_43] : memref<8x4xf32, #tpu.memory_space<vmem>>, vector<8x1xf32>
      tpu.vector_store %arg6[%c0_42, %c1_43], %66 {strides = array<i32>} : memref<8x4xf32, #tpu.memory_space<vmem>>, vector<8x1xf32>,
      %c0_44 = arith.constant 0 : index
      %c0_45 = arith.constant 0 : index
      %68 = vector.load %arg9[%c0_44, %c0_45] : memref<8x1xf32, #tpu.memory_space<vmem>>, vector<8x1xf32>
      %c0_46 = arith.constant 0 : index
      %c2 = arith.constant 2 : index
      %69 = vector.load %arg6[%c0_46, %c2] : memref<8x4xf32, #tpu.memory_space<vmem>>, vector<8x1xf32>
      tpu.vector_store %arg6[%c0_46, %c2], %68 {strides = array<i32>} : memref<8x4xf32, #tpu.memory_space<vmem>>, vector<8x1xf32>,
      %c0_47 = arith.constant 0 : index
      %c0_48 = arith.constant 0 : index
      %70 = vector.load %arg10[%c0_47, %c0_48] : memref<8x1xf32, #tpu.memory_space<vmem>>, vector<8x1xf32>
      %c0_49 = arith.constant 0 : index
      %c3 = arith.constant 3 : index
      %71 = vector.load %arg6[%c0_49, %c3] : memref<8x4xf32, #tpu.memory_space<vmem>>, vector<8x1xf32>
      tpu.vector_store %arg6[%c0_49, %c3], %70 {strides = array<i32>} : memref<8x4xf32, #tpu.memory_space<vmem>>, vector<8x1xf32>,
    } else {
    }
    return
  }
  func.func @transform_0(%arg0: i32, %arg1: i32) -> (i32, i32) {
    %c0_i32 = arith.constant 0 : i32
    %c0_i32_0 = arith.constant 0 : i32
    return %arg0, %c0_i32 : i32, i32
  }
  func.func @transform_1(%arg0: i32, %arg1: i32) -> (i32, i32) {
    %c0_i32 = arith.constant 0 : i32
    %c0_i32_0 = arith.constant 0 : i32
    return %arg1, %c0_i32 : i32, i32
  }
  func.func @transform_2(%arg0: i32, %arg1: i32) -> (i32, i32) {
    %c0_i32 = arith.constant 0 : i32
    %c0_i32_0 = arith.constant 0 : i32
    return %arg0, %c0_i32 : i32, i32
  }
  func.func @transform_3(%arg0: i32, %arg1: i32) -> (i32, i32) {
    %c0_i32 = arith.constant 0 : i32
    %c0_i32_0 = arith.constant 0 : i32
    return %c0_i32, %arg1 : i32, i32
  }
  func.func @transform_4(%arg0: i32, %arg1: i32) -> (i32, i32) {
    %c0_i32 = arith.constant 0 : i32
    %c0_i32_0 = arith.constant 0 : i32
    return %arg0, %c0_i32 : i32, i32
  }
}

</mosaic_0001>

<llo_original>
// kernel: tpu_custom_call.1
$region0: #{tpu_custom_call.1}
  #allocation0 [shape = 'u32[]', space=smem, size = 0x4, offset = 0x4, fixed_abs, tag = 'smem constant byte address 0x4 - core index']
  #allocation1 [shape = 'u32[144,128]{1,0:T(1,128)}', space=vmem, size = 0x12000, scoped, tag = 'internal scratch']
  #allocation2 [shape = 'f32[8,1]{1,0:T(8,128)}', space=vmem, size = 0x1000, scoped, tag = 'scratch operand']
  #allocation3 [shape = 'f32[8,1]{1,0:T(8,128)}', space=vmem, size = 0x1000, scoped, tag = 'scratch operand']
  #allocation4 [shape = 'f32[8,1]{1,0:T(8,128)}', space=vmem, size = 0x1000, scoped, tag = 'scratch operand']
  #allocation5 [shape = 'f32[8,1]{1,0:T(8,128)}', space=vmem, size = 0x1000, scoped, tag = 'scratch operand']
  %s0 = inlined_call_operand.vmem [shape: f32[8,128], index: 0, kind: input, shape index: {}]
  %s1 = inlined_call_operand.hbm [shape: f32[256,128], index: 1, kind: input, shape index: {}]
  %s2 = inlined_call_operand.vmem [shape: s32[8,2], index: 2, kind: input, shape index: {}]
  %s3 = inlined_call_operand.vmem [shape: s32[2,256], index: 3, kind: input, shape index: {}]
  %s4 = inlined_call_operand.vmem [shape: f32[8,4], index: 4, kind: output, shape index: {}]
  %s5 = sld [smem:[#allocation0]]
  $region38: #{tpu_custom_call.1} parent=0
    _
  %s7 = ssub.s32 1, %s5
  %s8 = scalar_select 0, %s7, %s5
  $region1: #{tpu_custom_call.1} parent=0
    #allocation6 [shape = 'u8[131072]{0}', space=vmem, size = 0x20000, scoped, tag = 'input window, operand 1, single buffered']
    #allocation7 [shape = 's32[1]{0}', space=sflag, size = 0x4, scoped, tag = 'scoped memory for tpu_custom_call.1']
    %9 = vsyncpa [#allocation7], 0
    // Predicated region
    $region2: #{tpu_custom_call.1} parent=1 // pred_check
      _
    $region3: #{tpu_custom_call.1} parent=1 // pred_check_branch
      %11 = sbr.rel (0) target = $region5
    $region4: #{tpu_custom_call.1} parent=1 // pred_region
      _
    $region5: #{tpu_custom_call.1} parent=1 // pred_fallthru
      _
    // Predicated region
    $region6: #{tpu_custom_call.1} parent=1 // pred_check
      _
    $region7: #{tpu_custom_call.1} parent=1 // pred_check_branch
      %13 = sbr.rel (0) target = $region9
    $region8: #{tpu_custom_call.1} parent=1 // pred_region
      %s15 = ssub.s32 4096, 4096
      %16 = vsyncadd [#allocation7], %s15
      %s17 = sshll.u32 [#allocation6], 4
      %s18 = int_to_ptr.vmem [resolvable:$true] %s17
      %23 = dma.hbm_to_vmem [thread:$0]  %s1, 4096, %s18, [#allocation7], 128, 128, 8
    $region9: #{tpu_custom_call.1} parent=1 // pred_fallthru
      _
    // Predicated region
    $region10: #{tpu_custom_call.1} parent=1 // pred_check
      _
    $region11: #{tpu_custom_call.1} parent=1 // pred_check_branch
      %25 = sbr.rel (0) target = $region13
    $region12: #{tpu_custom_call.1} parent=1 // pred_region
      _
    $region13: #{tpu_custom_call.1} parent=1 // pred_fallthru
      _
    // Predicated region
    $region14: #{tpu_custom_call.1} parent=1 // pred_check
      _
    $region15: #{tpu_custom_call.1} parent=1 // pred_check_branch
      %27 = sbr.rel (0) target = $region17
    $region16: #{tpu_custom_call.1} parent=1 // pred_region
      _
    $region17: #{tpu_custom_call.1} parent=1 // pred_fallthru
      _
    // Predicated region
    $region18: #{tpu_custom_call.1} parent=1 // pred_check
      _
    $region19: #{tpu_custom_call.1} parent=1 // pred_check_branch
      %29 = sbr.rel (0) target = $region21
    $region20: #{tpu_custom_call.1} parent=1 // pred_region
      %30 = dma.done [#allocation7], 4096
    $region21: #{tpu_custom_call.1} parent=1 // pred_fallthru
      _
    %p31 = scmp.eq.s32.totalorder 0, 0
    // Predicated region
    $region22: #{tpu_custom_call.1} parent=1 // pred_check
      %p32 = pneg %p31
    $region23: #{tpu_custom_call.1} parent=1 // pred_check_branch
      %34 = sbr.rel (%p32) target = $region25
    $region24: #{tpu_custom_call.1} parent=1 // pred_region
      %vm35 = vcmask 7168
      %36 = vst.msk [vmem:[#allocation2] sm:$0xff] %vm35, -1e+30
      %37 = vst.msk [vmem:[#allocation3] sm:$0xff] %vm35, 0.0
      %38 = vst.msk [vmem:[#allocation4] sm:$0xff] %vm35, 0.0
      %39 = vst.msk [vmem:[#allocation5] sm:$0xff] %vm35, 0.0
    $region25: #{tpu_custom_call.1} parent=1 // pred_fallthru
      _
    %v40 = vld [vmem:[%s0] sm:$0xff]
    %v41 = vld [vmem:[#allocation6] sm:$0xff]
    %v42 = vld [vmem:[#allocation6 + $0x8] sm:$0xff]
    %v43 = vld [vmem:[#allocation6 + $0x10] sm:$0xff]
    %v44 = vld [vmem:[#allocation6 + $0x18] sm:$0xff]
    %v45 = vld [vmem:[#allocation6 + $0x20] sm:$0xff]
    %v46 = vld [vmem:[#allocation6 + $0x28] sm:$0xff]
    %v47 = vld [vmem:[#allocation6 + $0x30] sm:$0xff]
    %v48 = vld [vmem:[#allocation6 + $0x38] sm:$0xff]
    %v49 = vld [vmem:[#allocation6 + $0x40] sm:$0xff]
    %v50 = vld [vmem:[#allocation6 + $0x48] sm:$0xff]
    %v51 = vld [vmem:[#allocation6 + $0x50] sm:$0xff]
    %v52 = vld [vmem:[#allocation6 + $0x58] sm:$0xff]
    %v53 = vld [vmem:[#allocation6 + $0x60] sm:$0xff]
    %v54 = vld [vmem:[#allocation6 + $0x68] sm:$0xff]
    %v55 = vld [vmem:[#allocation6 + $0x70] sm:$0xff]
    %v56 = vld [vmem:[#allocation6 + $0x78] sm:$0xff]
    %v57 = vld [vmem:[#allocation6 + $0x80] sm:$0xff]
    %v58 = vld [vmem:[#allocation6 + $0x88] sm:$0xff]
    %v59 = vld [vmem:[#allocation6 + $0x90] sm:$0xff]
    %v60 = vld [vmem:[#allocation6 + $0x98] sm:$0xff]
    %v61 = vld [vmem:[#allocation6 + $0xa0] sm:$0xff]
    %v62 = vld [vmem:[#allocation6 + $0xa8] sm:$0xff]
    %v63 = vld [vmem:[#allocation6 + $0xb0] sm:$0xff]
    %v64 = vld [vmem:[#allocation6 + $0xb8] sm:$0xff]
    %v65 = vld [vmem:[#allocation6 + $0xc0] sm:$0xff]
    %v66 = vld [vmem:[#allocation6 + $0xc8] sm:$0xff]
    %v67 = vld [vmem:[#allocation6 + $0xd0] sm:$0xff]
    %v68 = vld [vmem:[#allocation6 + $0xd8] sm:$0xff]
    %v69 = vld [vmem:[#allocation6 + $0xe0] sm:$0xff]
    %v70 = vld [vmem:[#allocation6 + $0xe8] sm:$0xff]
    %v71 = vld [vmem:[#allocation6 + $0xf0] sm:$0xff]
    %v72 = vld [vmem:[#allocation6 + $0xf8] sm:$0xff]
    %73 = vmatprep.subr.mxu0 0.0
    %74 = vmatpush1.xpose.msra.mxu0 %v41
    %75 = vmatprep.subr.mxu0 0.0
    %76 = vmatpush1.xpose.msra.mxu0 %v42
    %77 = vmatprep.subr.mxu0 0.0
    %78 = vmatpush1.xpose.msra.mxu0 %v43
    %79 = vmatprep.subr.mxu0 0.0
    %80 = vmatpush1.xpose.msra.mxu0 %v44
    %81 = vmatprep.subr.mxu0 0.0
    %82 = vmatpush1.xpose.msra.mxu0 %v45
    %83 = vmatprep.subr.mxu0 0.0
    %84 = vmatpush1.xpose.msra.mxu0 %v46
    %85 = vmatprep.subr.mxu0 0.0
    %86 = vmatpush1.xpose.msra.mxu0 %v47
    %87 = vmatprep.subr.mxu0 0.0
    %88 = vmatpush1.xpose.msra.mxu0 %v48
    %89 = vmatprep.subr.mxu0 0.0
    %90 = vmatpush1.xpose.msra.mxu0 %v49
    %91 = vmatprep.subr.mxu0 0.0
    %92 = vmatpush1.xpose.msra.mxu0 %v50
    %93 = vmatprep.subr.mxu0 0.0
    %94 = vmatpush1.xpose.msra.mxu0 %v51
    %95 = vmatprep.subr.mxu0 0.0
    %96 = vmatpush1.xpose.msra.mxu0 %v52
    %97 = vmatprep.subr.mxu0 0.0
    %98 = vmatpush1.xpose.msra.mxu0 %v53
    %99 = vmatprep.subr.mxu0 0.0
    %100 = vmatpush1.xpose.msra.mxu0 %v54
    %101 = vmatprep.subr.mxu0 0.0
    %102 = vmatpush1.xpose.msra.mxu0 %v55
    %103 = vmatprep.subr.mxu0 0.0
    %104 = vmatpush1.xpose.msra.mxu0 %v56
    %105 = vmatprep.subr.mxu0 0.0
    %106 = vmatpush1.xpose.msra.mxu0 %v57
    %107 = vmatprep.subr.mxu0 0.0
    %108 = vmatpush1.xpose.msra.mxu0 %v58
    %109 = vmatprep.subr.mxu0 0.0
    %110 = vmatpush1.xpose.msra.mxu0 %v59
    %111 = vmatprep.subr.mxu0 0.0
    %112 = vmatpush1.xpose.msra.mxu0 %v60
    %113 = vmatprep.subr.mxu0 0.0
    %114 = vmatpush1.xpose.msra.mxu0 %v61
    %115 = vmatprep.subr.mxu0 0.0
    %116 = vmatpush1.xpose.msra.mxu0 %v62
    %117 = vmatprep.subr.mxu0 0.0
    %118 = vmatpush1.xpose.msra.mxu0 %v63
    %119 = vmatprep.subr.mxu0 0.0
    %120 = vmatpush1.xpose.msra.mxu0 %v64
    %121 = vmatprep.subr.mxu0 0.0
    %122 = vmatpush1.xpose.msra.mxu0 %v65
    %123 = vmatprep.subr.mxu0 0.0
    %124 = vmatpush1.xpose.msra.mxu0 %v66
    %125 = vmatprep.subr.mxu0 0.0
    %126 = vmatpush1.xpose.msra.mxu0 %v67
    %127 = vmatprep.subr.mxu0 0.0
    %128 = vmatpush1.xpose.msra.mxu0 %v68
    %129 = vmatprep.subr.mxu0 0.0
    %130 = vmatpush1.xpose.msra.mxu0 %v69
    %131 = vmatprep.subr.mxu0 0.0
    %132 = vmatpush1.xpose.msra.mxu0 %v70
    %133 = vmatprep.subr.mxu0 0.0
    %134 = vmatpush1.xpose.msra.mxu0 %v71
    %135 = vmatprep.subr.mxu0 0.0
    %136 = vmatpush1.xpose.msra.mxu0 %v72
    %137 = vmatprep.mubr.f32.mxu0 0.0
    %138 = vmatmul.mubr.f32.gmra.mrb[0].mxu0 %v40
    %v139 = vpop.f32.mrb[0].mxu0
    %v140 = vadd.f32 0.0, %v139
    %v141 = vpop.f32.mrb[0].mxu0
    %v142 = vadd.f32 0.0, %v141
    %143 = vdwg.mxu0
    %v144 = vlaneseq
    %v145 = vand.u32 %v144, 127
    %v146 = vadd.s32 %v145, 128
    %s147 = smul.u32 0, 256
    %v148 = vstv %s147
    %v149 = vadd.s32 %v145, %v148
    %v150 = vadd.s32 %v146, %v148
    %vm151 = vcmp.lt.s32.totalorder %v149, 16
    %vm152 = vcmp.lt.s32.totalorder %v150, 16
    %v153 = vld [vmem:[%s2] sm:$0xff]
    %v154 = vld [vmem:[%s3] ss:$2 sm:$0x3]
    %s155 = scalar_lea.vmem %s3, 1
    %v156 = vld [vmem:[%s155] ss:$2 sm:$0x3]
    %157 = vset.pattern.permute.xlu0 1
    %158 = vperm.xlu0 %157, %v153
    %v159 = vpop.permute.xlu0 %158
    %v160 = vlaneseq
    %v161 = vshrl.u32 %v160, 7
    %v162 = vsub.s32 0, %v161
    %v163 = vrot.slane %v156, %v162
    %v164 = vlaneseq
    %v165 = vshrl.u32 %v164, 7
    %v166 = vsub.s32 1, %v165
    %v167 = vrot.slane %v156, %v166
    %vm168 = vcmp.ne.s32.totalorder %v159, %v163
    %vm169 = vcmp.ne.s32.totalorder %v159, %v167
    %v170 = vsel %vm151, 1, 0
    %v171 = vsel %vm152, 1, 0
    %vm172 = vcmp.eq.s32.totalorder %v170, 1
    %vm173 = vcmp.eq.s32.totalorder %v171, 1
    %vm174 = vmand %vm168, %vm172
    %vm175 = vmand %vm169, %vm173
    %176 = vset.pattern.permute.xlu0 0
    %177 = vperm.xlu0 %176, %v153
    %v178 = vpop.permute.xlu0 %177
    %v179 = vlaneseq
    %v180 = vshrl.u32 %v179, 7
    %v181 = vsub.s32 0, %v180
    %v182 = vrot.slane %v154, %v181
    %v183 = vlaneseq
    %v184 = vshrl.u32 %v183, 7
    %v185 = vsub.s32 1, %v184
    %v186 = vrot.slane %v154, %v185
    %vm187 = vcmp.eq.s32.totalorder %v178, %v182
    %vm188 = vcmp.eq.s32.totalorder %v178, %v186
    %vm189 = vmand %vm174, %vm187
    %vm190 = vmand %vm175, %vm188
    %v191 = vsel %vm172, %v140, -1e+30
    %v192 = vsel %vm173, %v142, -1e+30
    %v193 = vld [vmem:[#allocation2] sm:$0xff]
    %v194 = vmax.f32 %v191, %v192
    %195 = vmax.xlane.f32.xlu0 %v194
    %v196 = vpop.xlane.xlu0 %195
    %v197 = vmax.f32 %v193, %v196
    %199 = vset.pattern.permute.xlu0 0
    %200 = vperm.xlu0 %199, %v197
    %v201 = vpop.permute.xlu0 %200
    %v203 = vsub.f32 %v191, %v201
    %v204 = vsub.f32 %v192, %v201
    %v205 = vmul.f32 %v203, 1.442695
    %v206 = vpow.pop %v205
    %v207 = vmul.f32 %v204, 1.442695
    %v208 = vpow.pop %v207
    %v209 = vsel %vm174, %v206, 0.0
    %v210 = vsel %vm175, %v208, 0.0
    %v211 = vsub.f32 %v193, %v197
    %v212 = vmul.f32 %v211, 1.442695
    %v213 = vpow.pop %v212
    %v214 = vld [vmem:[#allocation3] sm:$0xff]
    %v215 = vmul.f32 %v213, %v214
    %v216 = vadd.f32 %v209, %v210
    %217 = vadd.xlane.f32.xlu0 %v216
    %v218 = vpop.xlane.xlu0 %217
    %v219 = vadd.f32 %v215, %v218
    %vm220 = vcmask 7168
    %221 = vst.msk [vmem:[#allocation3] sm:$0xff] %vm220, %v219
    %222 = vst.msk [vmem:[#allocation2] sm:$0xff] %vm220, %v197
    %v223 = vld [vmem:[#allocation4] sm:$0xff]
    %v224 = vsel %vm189, %v140, 0.0
    %v225 = vsel %vm190, %v142, 0.0
    %v226 = vadd.f32 %v224, %v225
    %227 = vadd.xlane.f32.xlu0 %v226
    %v228 = vpop.xlane.xlu0 %227
    %v229 = vadd.f32 %v223, %v228
    %230 = vst.msk [vmem:[#allocation4] sm:$0xff] %vm220, %v229
    %v231 = vld [vmem:[#allocation5] sm:$0xff]
    %v232 = vsel %vm189, 1, 0
    %v233 = vsel %vm190, 1, 0
    %v234 = vcvt.s32.f32 %v232
    %v235 = vcvt.s32.f32 %v233
    %v236 = vadd.f32 %v234, %v235
    %237 = vadd.xlane.f32.xlu0 %v236
    %v238 = vpop.xlane.xlu0 %237
    %v239 = vadd.f32 %v231, %v238
    %240 = vst.msk [vmem:[#allocation5] sm:$0xff] %vm220, %v239
    // Predicated region
    $region26: #{tpu_custom_call.1} parent=1 // pred_check
      %p241 = pneg %p31
    $region27: #{tpu_custom_call.1} parent=1 // pred_check_branch
      %243 = sbr.rel (%p241) target = $region29
    $region28: #{tpu_custom_call.1} parent=1 // pred_region
      %v244 = vld [vmem:[#allocation2] sm:$0xff]
      %245 = vst.msk [vmem:[%s4] sm:$0xff] %vm220, %v244
      %v246 = vld [vmem:[#allocation3] sm:$0xff]
      %248 = vrot.lane.b32.xlu0 %v246, 1
      %v249 = vpop.permute.xlu0 %248
      %vm251 = vcmask 15368
      %252 = vst.msk [vmem:[%s4] sm:$0xff] %vm251, %v249
      %v253 = vld [vmem:[#allocation4] sm:$0xff]
      %255 = vrot.lane.b32.xlu0 %v253, 2
      %v256 = vpop.permute.xlu0 %255
      %vm258 = vcmask 23568
      %259 = vst.msk [vmem:[%s4] sm:$0xff] %vm258, %v256
      %v260 = vld [vmem:[#allocation5] sm:$0xff]
      %262 = vrot.lane.b32.xlu0 %v260, 3
      %v263 = vpop.permute.xlu0 %262
      %vm265 = vcmask 31768
      %266 = vst.msk [vmem:[%s4] sm:$0xff] %vm265, %v263
    $region29: #{tpu_custom_call.1} parent=1 // pred_fallthru
      _
    // Predicated region
    $region30: #{tpu_custom_call.1} parent=1 // pred_check
      _
    $region31: #{tpu_custom_call.1} parent=1 // pred_check_branch
      %268 = sbr.rel (0) target = $region33
    $region32: #{tpu_custom_call.1} parent=1 // pred_region
      _
    $region33: #{tpu_custom_call.1} parent=1 // pred_fallthru
      _
    // Predicated region
    $region34: #{tpu_custom_call.1} parent=1 // pred_check
      _
    $region35: #{tpu_custom_call.1} parent=1 // pred_check_branch
      %270 = sbr.rel (0) target = $region37
    $region36: #{tpu_custom_call.1} parent=1 // pred_region
      _
    $region37: #{tpu_custom_call.1} parent=1 // pred_fallthru
      _
    %271 = vsyncpa [#allocation7], 1

</llo_original>
